<compile_context>
chip_gen: v7x
topology: tpu7x:2x2x1
jax: 0.10.0
libtpu: 0.0.40
codegen_flags: <defaults>
</compile_context>

<pallas_src>
import functools

import jax
import jax.numpy as jnp
from jax.experimental import pallas as pl
from jax.experimental.pallas import tpu as pltpu


LAYER_DIMS = [(78, 64), (64, 32), (32, 16), (16, 8), (8, 1)]


def mlp_kernel(x_ref, w1_ref, w2_ref, w3t_ref, w4t_ref, w5t_ref,
               b1_ref, b2_ref, b3_ref, b4_ref, b5_ref, o_ref,
               *, approx_recip):
    """One batch tile of the 5-layer MLP. Weights/biases are VMEM-resident."""
    cdt = w1_ref.dtype  # streaming/compute dtype (bf16 or f32)

    # ---- head: batch on sublanes, features on lanes (K<=78, one MXU pass) ---
    h = jnp.dot(x_ref[...], w1_ref[...], preferred_element_type=jnp.float32)
    h = jnp.maximum(h + b1_ref[...], 0.0).astype(cdt)                # (tb, 64)
    h = jnp.dot(h, w2_ref[...], preferred_element_type=jnp.float32)
    h = jnp.maximum(h + b2_ref[...], 0.0)                            # (tb, 32) f32

    # ---- tail: batch on the 128-lane axis (weights stored (out, in)). -------
    # The (tb,32)->(32,tb) transpose rides the XLU; tail vmatmul count drops
    # ~8x vs the batch-major form and fc5 output is lane-dense for free.
    ht = h.T.astype(cdt)                                             # (32, tb)
    ht = jnp.dot(w3t_ref[...], ht, preferred_element_type=jnp.float32)
    ht = jnp.maximum(ht + b3_ref[...], 0.0).astype(cdt)              # (16, tb)
    ht = jnp.dot(w4t_ref[...], ht, preferred_element_type=jnp.float32)
    ht = jnp.maximum(ht + b4_ref[...], 0.0).astype(cdt)              # (8, tb)
    z = jnp.dot(w5t_ref[...], ht, preferred_element_type=jnp.float32)
    z = z + b5_ref[...]                                              # (1, tb) f32

    # sigmoid: exp on the EUP; approx reciprocal also lands on the EUP slot.
    o_ref[...] = pl.reciprocal(1.0 + jnp.exp(-z), approx=approx_recip)


def _cdiv(a, b):
    return -(-a // b)


def _round_up(n, m):
    return ((n + m - 1) // m) * m


def _choose_tile(batch, block_rows, min_steps):
    """Batch tile: multiple of 128 (lane-aligned transposed tail / output),
    capped by block_rows and by "at least min_steps grid steps" so the
    parallel batch axis can shard across v7x's two TensorCores and the DMA
    pipeline has tiles to prefetch."""
    tb = max(128, (block_rows // 128) * 128)
    per_step = _round_up(_cdiv(batch, max(1, min_steps)), 128)
    return max(128, min(tb, per_step))


def _vmem_limit_bytes(tb, x_itemsize):
    """Padded VMEM footprint estimate (double-buffered blocks + intermediates)."""
    lane = 128
    x_block = tb * lane * x_itemsize            # 78 lanes pad to 128
    out_block = 8 * tb * 4                      # (1, tb) f32, 1 sublane pads to 8
    params = 256 * 1024                         # all weights+biases, padded, x2 buffers
    # f32 h1/h2 (lane-padded) + compute-dtype copies + transposed-tail f32s.
    scratch = 2 * tb * lane * 4 + 2 * tb * lane * x_itemsize + 64 * tb * 4
    est = 2 * (x_block + out_block) + params + scratch
    est = int(est * 1.5) + (1 << 20)            # margin for compiler scratch
    # Floor at the most restrictive per-generation default (32 MiB); cap well
    # below v7x's 64 MiB physical VMEM.
    return max(32 * 1024 * 1024, min(est, 56 * 1024 * 1024))


def prepare_params(params, compute_dtype=jnp.bfloat16):
    """params: list of (W (in,out) f32, b (out,) f32) for the five layers.

    Returns (weights, biases):
      weights: (w1 (78,64), w2 (64,32), w3t (16,32), w4t (8,16), w5t (1,8))
               in `compute_dtype`; fc3..fc5 pre-transposed to (out, in).
      biases:  f32, (1,64)/(1,32) rows for the head, (16,1)/(8,1)/(1,1)
               columns for the transposed tail (natural broadcast shapes,
               no in-kernel lane sub-slicing).
    """
    (w1, b1), (w2, b2), (w3, b3), (w4, b4), (w5, b5) = params
    weights = (
        w1.astype(compute_dtype),
        w2.astype(compute_dtype),
        w3.T.astype(compute_dtype),
        w4.T.astype(compute_dtype),
        w5.T.astype(compute_dtype),
    )
    biases = (
        b1.astype(jnp.float32).reshape(1, -1),
        b2.astype(jnp.float32).reshape(1, -1),
        b3.astype(jnp.float32).reshape(-1, 1),
        b4.astype(jnp.float32).reshape(-1, 1),
        b5.astype(jnp.float32).reshape(-1, 1),
    )
    return weights, biases


def net_forward(x, weights, biases, *, block_rows=2048, min_steps=4,
                approx_recip=None):
    """x: (B, 78) f32/bf16. weights/biases from prepare_params.
    Returns (B, 1) f32 sigmoid outputs."""
    B, F = x.shape
    assert F == LAYER_DIMS[0][0]
    cdt = weights[0].dtype
    if approx_recip is None:
        approx_recip = cdt == jnp.bfloat16

    tb = _choose_tile(B, block_rows, min_steps)
    num_blocks = _cdiv(B, tb)
    b_pad = num_blocks * tb

    # Stream x in the compute dtype; zero-pad ragged batches so no undefined
    # rows ever enter the kernel (padded rows are sliced away below).
    x_in = x.astype(cdt)
    if b_pad != B:
        x_in = jnp.pad(x_in, ((0, b_pad - B), (0, 0)))

    in_specs = [
        pl.BlockSpec((tb, F), lambda i: (i, 0)),
        *[pl.BlockSpec(w.shape, lambda i: (0, 0)) for w in weights],
        *[pl.BlockSpec(b.shape, lambda i: (0, 0)) for b in biases],
    ]
    # Lane-dense output: one (1, tb) row per grid step into a (1, B_pad) slab.
    out_spec = pl.BlockSpec((1, tb), lambda i: (0, i))

    x_itemsize = jnp.dtype(cdt).itemsize
    flops = 2 * B * sum(i * o for i, o in LAYER_DIMS)
    bytes_accessed = (
        B * F * x_itemsize + B * 4
        + sum(int(w.size) * w.dtype.itemsize for w in weights)
        + sum(int(b.size) * 4 for b in biases)
    )
    cost = pl.CostEstimate(flops=flops, transcendentals=2 * B,
                           bytes_accessed=bytes_accessed)

    kernel = functools.partial(mlp_kernel, approx_recip=approx_recip)
    out = pl.pallas_call(
        kernel,
        out_shape=jax.ShapeDtypeStruct((1, b_pad), jnp.float32),
        grid_spec=pltpu.PrefetchScalarGridSpec(
            num_scalar_prefetch=0,
            grid=(num_blocks,),
            in_specs=in_specs,
            out_specs=out_spec,
        ),
        compiler_params=pltpu.CompilerParams(
            # Batch axis is embarrassingly parallel -> shards across both
            # TensorCores on v7x; no-op elsewhere.
            dimension_semantics=("parallel",),
            vmem_limit_bytes=_vmem_limit_bytes(tb, x_itemsize),
        ),
        cost_estimate=cost,
    )(x_in, *weights, *biases)

    return out[0, :B].reshape(B, 1)


def init_linear(key, in_f, out_f):
    """Mirror torch.nn.Linear default init (uniform +-1/sqrt(in_features))."""
    kw, kb = jax.random.split(key)
    bound = 1.0 / jnp.sqrt(jnp.float32(in_f))
    w = jax.random.uniform(kw, (in_f, out_f), jnp.float32, -bound, bound)
    b = jax.random.uniform(kb, (out_f,), jnp.float32, -bound, bound)
    return w, b


def make_params(key):
    keys = jax.random.split(key, len(LAYER_DIMS))
    return [init_linear(k, i, o) for k, (i, o) in zip(keys, LAYER_DIMS)]


def reference_forward(x, params):
    h = x
    for i, (w, b) in enumerate(params):
        h = h @ w + b
        h = jnp.maximum(h, 0.0) if i < len(params) - 1 else jax.nn.sigmoid(h)
    return h


if __name__ == "__main__":
    key = jax.random.PRNGKey(0)
    k_params, k_x = jax.random.split(key)

    params = make_params(k_params)
    B = 512
    x = jax.random.normal(k_x, (B, 78), dtype=jnp.float32)
    ref = reference_forward(x, params)

    # (1) f32 path, tb=128 -> 4 grid steps; exact-math check.
    w_f32, b_f32 = prepare_params(params, jnp.float32)
    out_f32 = jax.block_until_ready(net_forward(x, w_f32, b_f32, block_rows=128))
    assert out_f32.shape == (B, 1)
    assert jnp.allclose(out_f32, ref, atol=1e-4, rtol=1e-4)

    # (2) ragged batch (exercises the zero-pad + output-slice path).
    Br = 300
    out_r = jax.block_until_ready(net_forward(x[:Br], w_f32, b_f32,
                                              block_rows=128))
    assert out_r.shape == (Br, 1)
    assert jnp.allclose(out_r, ref[:Br], atol=1e-4, rtol=1e-4)

    # (3) optimized bf16-streaming path (relaxed tolerance for bf16 rounding).
    w_bf16, b_bf16 = prepare_params(params, jnp.bfloat16)
    out_bf16 = jax.block_until_ready(net_forward(x, w_bf16, b_bf16))
    assert out_bf16.shape == (B, 1)
    assert jnp.allclose(out_bf16, ref, atol=2e-2, rtol=2e-2)

    print("KERNEL_OK")
</pallas_src>

<mosaic_0001>
module attributes {stable_mosaic.version = 11 : i64} {
  func.func @mlp_kernel(%arg0: i32, %arg1: memref<128x78xf32, #tpu.memory_space<vmem>>, %arg2: memref<78x64xf32, #tpu.memory_space<vmem>>, %arg3: memref<64x32xf32, #tpu.memory_space<vmem>>, %arg4: memref<16x32xf32, #tpu.memory_space<vmem>>, %arg5: memref<8x16xf32, #tpu.memory_space<vmem>>, %arg6: memref<1x8xf32, #tpu.memory_space<vmem>>, %arg7: memref<1x64xf32, #tpu.memory_space<vmem>>, %arg8: memref<1x32xf32, #tpu.memory_space<vmem>>, %arg9: memref<16x1xf32, #tpu.memory_space<vmem>>, %arg10: memref<8x1xf32, #tpu.memory_space<vmem>>, %arg11: memref<1x1xf32, #tpu.memory_space<vmem>>, %arg12: memref<1x128xf32, #tpu.memory_space<vmem>>) attributes {dimension_semantics = [#tpu.dimension_semantics<parallel>], iteration_bounds = array<i64: 4>, scalar_prefetch = 0 : i64, scratch_operands = 0 : i64, tpu.core_type = #tpu.core_type<tc>, window_params = [{transform_indices = @transform_0, window_bounds = array<i64: 128, 78>}, {pipeline_mode = #tpu.pipeline_mode<synchronous>, transform_indices = @transform_1, window_bounds = array<i64: 78, 64>}, {pipeline_mode = #tpu.pipeline_mode<synchronous>, transform_indices = @transform_2, window_bounds = array<i64: 64, 32>}, {pipeline_mode = #tpu.pipeline_mode<synchronous>, transform_indices = @transform_3, window_bounds = array<i64: 16, 32>}, {pipeline_mode = #tpu.pipeline_mode<synchronous>, transform_indices = @transform_4, window_bounds = array<i64: 8, 16>}, {pipeline_mode = #tpu.pipeline_mode<synchronous>, transform_indices = @transform_5, window_bounds = array<i64: 1, 8>}, {pipeline_mode = #tpu.pipeline_mode<synchronous>, transform_indices = @transform_6, window_bounds = array<i64: 1, 64>}, {pipeline_mode = #tpu.pipeline_mode<synchronous>, transform_indices = @transform_7, window_bounds = array<i64: 1, 32>}, {pipeline_mode = #tpu.pipeline_mode<synchronous>, transform_indices = @transform_8, window_bounds = array<i64: 16, 1>}, {pipeline_mode = #tpu.pipeline_mode<synchronous>, transform_indices = @transform_9, window_bounds = array<i64: 8, 1>}, {pipeline_mode = #tpu.pipeline_mode<synchronous>, transform_indices = @transform_10, window_bounds = array<i64: 1, 1>}, {transform_indices = @transform_11, window_bounds = array<i64: 1, 128>}]} {
    %c0 = arith.constant 0 : index
    %c0_0 = arith.constant 0 : index
    %0 = vector.load %arg1[%c0, %c0_0] : memref<128x78xf32, #tpu.memory_space<vmem>>, vector<128x78xf32>
    %c0_1 = arith.constant 0 : index
    %c0_2 = arith.constant 0 : index
    %1 = vector.load %arg2[%c0_1, %c0_2] : memref<78x64xf32, #tpu.memory_space<vmem>>, vector<78x64xf32>
    %cst = arith.constant dense<0.000000e+00> : vector<128x64xf32>
    %2 = tpu.matmul %0, %1, %cst {dimension_numbers = #tpu.dot_dimension_numbers<[1], [0], [0], [1], [0, 0, 1, 1], [], []>} : vector<128x78xf32>, vector<78x64xf32>, vector<128x64xf32> -> vector<128x64xf32>
    %c0_3 = arith.constant 0 : index
    %c0_4 = arith.constant 0 : index
    %3 = vector.load %arg7[%c0_3, %c0_4] : memref<1x64xf32, #tpu.memory_space<vmem>>, vector<1x64xf32>
    %4 = vector.broadcast %3 : vector<1x64xf32> to vector<128x64xf32>
    %5 = arith.addf %2, %4 : vector<128x64xf32>
    %cst_5 = arith.constant 0.000000e+00 : f32
    %6 = vector.broadcast %cst_5 : f32 to vector<128x64xf32>
    %7 = arith.maximumf %5, %6 : vector<128x64xf32>
    %c0_6 = arith.constant 0 : index
    %c0_7 = arith.constant 0 : index
    %8 = vector.load %arg3[%c0_6, %c0_7] : memref<64x32xf32, #tpu.memory_space<vmem>>, vector<64x32xf32>
    %cst_8 = arith.constant dense<0.000000e+00> : vector<128x32xf32>
    %9 = tpu.matmul %7, %8, %cst_8 {dimension_numbers = #tpu.dot_dimension_numbers<[1], [0], [0], [1], [0, 0, 1, 1], [], []>} : vector<128x64xf32>, vector<64x32xf32>, vector<128x32xf32> -> vector<128x32xf32>
    %c0_9 = arith.constant 0 : index
    %c0_10 = arith.constant 0 : index
    %10 = vector.load %arg8[%c0_9, %c0_10] : memref<1x32xf32, #tpu.memory_space<vmem>>, vector<1x32xf32>
    %11 = vector.broadcast %10 : vector<1x32xf32> to vector<128x32xf32>
    %12 = arith.addf %9, %11 : vector<128x32xf32>
    %cst_11 = arith.constant 0.000000e+00 : f32
    %13 = vector.broadcast %cst_11 : f32 to vector<128x32xf32>
    %14 = arith.maximumf %12, %13 : vector<128x32xf32>
    %15 = tpu.transpose %14, [1, 0] : vector<128x32xf32> -> vector<32x128xf32>
    %c0_12 = arith.constant 0 : index
    %c0_13 = arith.constant 0 : index
    %16 = vector.load %arg4[%c0_12, %c0_13] : memref<16x32xf32, #tpu.memory_space<vmem>>, vector<16x32xf32>
    %cst_14 = arith.constant dense<0.000000e+00> : vector<16x128xf32>
    %17 = tpu.matmul %16, %15, %cst_14 {dimension_numbers = #tpu.dot_dimension_numbers<[1], [0], [0], [1], [0, 0, 1, 1], [], []>} : vector<16x32xf32>, vector<32x128xf32>, vector<16x128xf32> -> vector<16x128xf32>
    %c0_15 = arith.constant 0 : index
    %c0_16 = arith.constant 0 : index
    %18 = vector.load %arg9[%c0_15, %c0_16] : memref<16x1xf32, #tpu.memory_space<vmem>>, vector<16x1xf32>
    %19 = vector.broadcast %18 : vector<16x1xf32> to vector<16x128xf32>
    %20 = arith.addf %17, %19 : vector<16x128xf32>
    %cst_17 = arith.constant 0.000000e+00 : f32
    %21 = vector.broadcast %cst_17 : f32 to vector<16x128xf32>
    %22 = arith.maximumf %20, %21 : vector<16x128xf32>
    %c0_18 = arith.constant 0 : index
    %c0_19 = arith.constant 0 : index
    %23 = vector.load %arg5[%c0_18, %c0_19] : memref<8x16xf32, #tpu.memory_space<vmem>>, vector<8x16xf32>
    %cst_20 = arith.constant dense<0.000000e+00> : vector<8x128xf32>
    %24 = tpu.matmul %23, %22, %cst_20 {dimension_numbers = #tpu.dot_dimension_numbers<[1], [0], [0], [1], [0, 0, 1, 1], [], []>} : vector<8x16xf32>, vector<16x128xf32>, vector<8x128xf32> -> vector<8x128xf32>
    %c0_21 = arith.constant 0 : index
    %c0_22 = arith.constant 0 : index
    %25 = vector.load %arg10[%c0_21, %c0_22] : memref<8x1xf32, #tpu.memory_space<vmem>>, vector<8x1xf32>
    %26 = vector.broadcast %25 : vector<8x1xf32> to vector<8x128xf32>
    %27 = arith.addf %24, %26 : vector<8x128xf32>
    %cst_23 = arith.constant 0.000000e+00 : f32
    %28 = vector.broadcast %cst_23 : f32 to vector<8x128xf32>
    %29 = arith.maximumf %27, %28 : vector<8x128xf32>
    %c0_24 = arith.constant 0 : index
    %c0_25 = arith.constant 0 : index
    %30 = vector.load %arg6[%c0_24, %c0_25] : memref<1x8xf32, #tpu.memory_space<vmem>>, vector<1x8xf32>
    %cst_26 = arith.constant dense<0.000000e+00> : vector<1x128xf32>
    %31 = tpu.matmul %30, %29, %cst_26 {dimension_numbers = #tpu.dot_dimension_numbers<[1], [0], [0], [1], [0, 0, 1, 1], [], []>} : vector<1x8xf32>, vector<8x128xf32>, vector<1x128xf32> -> vector<1x128xf32>
    %c0_27 = arith.constant 0 : index
    %c0_28 = arith.constant 0 : index
    %32 = vector.load %arg11[%c0_27, %c0_28] : memref<1x1xf32, #tpu.memory_space<vmem>>, vector<1x1xf32>
    %33 = vector.broadcast %32 : vector<1x1xf32> to vector<1x128xf32>
    %34 = arith.addf %31, %33 : vector<1x128xf32>
    %cst_29 = arith.constant 0.000000e+00 : f32
    %35 = vector.broadcast %cst_29 : f32 to vector<1x128xf32>
    %36 = arith.subf %35, %34 : vector<1x128xf32>
    %37 = math.exp %36 : vector<1x128xf32>
    %cst_30 = arith.constant 1.000000e+00 : f32
    %38 = vector.broadcast %cst_30 : f32 to vector<1x128xf32>
    %39 = arith.addf %38, %37 : vector<1x128xf32>
    %40 = tpu.reciprocal %39 : vector<1x128xf32> -> vector<1x128xf32>
    %c0_31 = arith.constant 0 : index
    %c0_32 = arith.constant 0 : index
    %41 = vector.load %arg12[%c0_31, %c0_32] : memref<1x128xf32, #tpu.memory_space<vmem>>, vector<1x128xf32>
    tpu.vector_store %arg12[%c0_31, %c0_32], %40 {strides = array<i32>} : memref<1x128xf32, #tpu.memory_space<vmem>>, vector<1x128xf32>,
    return
  }
  func.func @transform_0(%arg0: i32) -> (i32, i32) {
    %c0_i32 = arith.constant 0 : i32
    %c0_i32_0 = arith.constant 0 : i32
    return %arg0, %c0_i32 : i32, i32
  }
  func.func @transform_1(%arg0: i32) -> (i32, i32) {
    %c0_i32 = arith.constant 0 : i32
    %c0_i32_0 = arith.constant 0 : i32
    %c0_i32_1 = arith.constant 0 : i32
    return %c0_i32, %c0_i32_0 : i32, i32
  }
  func.func @transform_2(%arg0: i32) -> (i32, i32) {
    %c0_i32 = arith.constant 0 : i32
    %c0_i32_0 = arith.constant 0 : i32
    %c0_i32_1 = arith.constant 0 : i32
    return %c0_i32, %c0_i32_0 : i32, i32
  }
  func.func @transform_3(%arg0: i32) -> (i32, i32) {
    %c0_i32 = arith.constant 0 : i32
    %c0_i32_0 = arith.constant 0 : i32
    %c0_i32_1 = arith.constant 0 : i32
    return %c0_i32, %c0_i32_0 : i32, i32
  }
  func.func @transform_4(%arg0: i32) -> (i32, i32) {
    %c0_i32 = arith.constant 0 : i32
    %c0_i32_0 = arith.constant 0 : i32
    %c0_i32_1 = arith.constant 0 : i32
    return %c0_i32, %c0_i32_0 : i32, i32
  }
  func.func @transform_5(%arg0: i32) -> (i32, i32) {
    %c0_i32 = arith.constant 0 : i32
    %c0_i32_0 = arith.constant 0 : i32
    %c0_i32_1 = arith.constant 0 : i32
    return %c0_i32, %c0_i32_0 : i32, i32
  }
  func.func @transform_6(%arg0: i32) -> (i32, i32) {
    %c0_i32 = arith.constant 0 : i32
    %c0_i32_0 = arith.constant 0 : i32
    %c0_i32_1 = arith.constant 0 : i32
    return %c0_i32, %c0_i32_0 : i32, i32
  }
  func.func @transform_7(%arg0: i32) -> (i32, i32) {
    %c0_i32 = arith.constant 0 : i32
    %c0_i32_0 = arith.constant 0 : i32
    %c0_i32_1 = arith.constant 0 : i32
    return %c0_i32, %c0_i32_0 : i32, i32
  }
  func.func @transform_8(%arg0: i32) -> (i32, i32) {
    %c0_i32 = arith.constant 0 : i32
    %c0_i32_0 = arith.constant 0 : i32
    %c0_i32_1 = arith.constant 0 : i32
    return %c0_i32, %c0_i32_0 : i32, i32
  }
  func.func @transform_9(%arg0: i32) -> (i32, i32) {
    %c0_i32 = arith.constant 0 : i32
    %c0_i32_0 = arith.constant 0 : i32
    %c0_i32_1 = arith.constant 0 : i32
    return %c0_i32, %c0_i32_0 : i32, i32
  }
  func.func @transform_10(%arg0: i32) -> (i32, i32) {
    %c0_i32 = arith.constant 0 : i32
    %c0_i32_0 = arith.constant 0 : i32
    %c0_i32_1 = arith.constant 0 : i32
    return %c0_i32, %c0_i32_0 : i32, i32
  }
  func.func @transform_11(%arg0: i32) -> (i32, i32) {
    %c0_i32 = arith.constant 0 : i32
    %c0_i32_0 = arith.constant 0 : i32
    return %c0_i32, %arg0 : i32, i32
  }
}

</mosaic_0001>

<llo_original>
// kernel: tpu_custom_call.1
$region0: #{tpu_custom_call.1}
  #allocation0 [shape = 'u32[]', space=smem, size = 0x4, offset = 0x4, fixed_abs, tag = 'smem constant byte address 0x4 - core index']
  #allocation1 [shape = 'u32[144,128]{1,0:T(1,128)}', space=vmem, size = 0x12000, scoped, tag = 'internal scratch']
  #allocation2 [shape = 'f32[1,1]{1,0:T(1,128)S(1)}', space=vmem, size = 0x200, scoped, tag = 'scoped memory for tpu_custom_call.1']
  %s0 = inlined_call_operand.vmem [shape: f32[512,78], index: 0, kind: input, shape index: {}]
  %s1 = inlined_call_operand.vmem [shape: f32[78,64], index: 1, kind: input, shape index: {}]
  %s2 = inlined_call_operand.vmem [shape: f32[64,32], index: 2, kind: input, shape index: {}]
  %s3 = inlined_call_operand.vmem [shape: f32[16,32], index: 3, kind: input, shape index: {}]
  %s4 = inlined_call_operand.vmem [shape: f32[8,16], index: 4, kind: input, shape index: {}]
  %s5 = inlined_call_operand.vmem [shape: f32[1,8], index: 5, kind: input, shape index: {}]
  %s6 = inlined_call_operand.vmem [shape: f32[1,64], index: 6, kind: input, shape index: {}]
  %s7 = inlined_call_operand.vmem [shape: f32[1,32], index: 7, kind: input, shape index: {}]
  %s8 = inlined_call_operand.vmem [shape: f32[16,1], index: 8, kind: input, shape index: {}]
  %s9 = inlined_call_operand.vmem [shape: f32[8,1], index: 9, kind: input, shape index: {}]
  %s10 = inlined_call_operand.<no memory space> [shape: f32[1,1], index: 10, kind: input, shape index: {}]
  %s11 = inlined_call_operand.hbm [shape: f32[1,512], index: 11, kind: output, shape index: {}]
  %s12 = sld [smem:[#allocation0]]
  $region77: #{tpu_custom_call.1} parent=0
    _
  %s14 = ssub.s32 1, %s12
  %s15 = scalar_select 0, %s14, %s12
  %v16 = vstv %s10
  %17 = vst [vmem:[#allocation2] sm:$0x1] %v16
  $region1: #{tpu_custom_call.1} parent=0
    #allocation3 [shape = 'u8[1024]{0}', space=vmem, size = 0x400, scoped, tag = 'output window, operand 0']
    #allocation4 [shape = 's32[2]{0}', space=sflag, size = 0x8, scoped, tag = 'scoped memory for tpu_custom_call.1']
    %18 = vsyncpa [#allocation4], 0
    %s19 = scalar_lea.sflag [#allocation4], 1
    %20 = vsyncpa %s19, 0
    loop: start=0, step=1, limit=6
    $region2: #{tpu_custom_call.1} parent=1 // loop_pre_header
      _
    $region3: #{tpu_custom_call.1} parent=1 // loop_header
      %s22 = sphi 0, %s26
      %p23 = scmp.ge.s32.totalorder %s22, 6
      %s32 = sphi 0, %s34
      %s35 = sphi 0, %s32
      %s36 = sphi 0, %s35
      %s52 = sphi 0, %s36
      %s56 = sphi 0, %s56
      %s58 = sphi 0, %s56
      %s59 = sphi 0, %s58
      %s73 = sphi 0, %s59
      %s77 = sphi 0, %s77
      %s79 = sphi 0, %s77
      %s80 = sphi 0, %s79
      %s94 = sphi 0, %s80
      %s98 = sphi 0, %s98
      %s100 = sphi 0, %s98
      %s101 = sphi 0, %s100
      %s115 = sphi 0, %s101
      %s119 = sphi 0, %s119
      %s121 = sphi 0, %s119
      %s122 = sphi 0, %s121
      %s136 = sphi 0, %s122
      %s140 = sphi 0, %s140
      %s142 = sphi 0, %s140
      %s143 = sphi 0, %s142
      %s157 = sphi 0, %s143
      %s161 = sphi 0, %s161
      %s163 = sphi 0, %s161
      %s164 = sphi 0, %s163
      %s178 = sphi 0, %s164
      %s182 = sphi 0, %s182
      %s184 = sphi 0, %s182
      %s185 = sphi 0, %s184
      %s199 = sphi 0, %s185
      %s203 = sphi 0, %s203
      %s205 = sphi 0, %s203
      %s206 = sphi 0, %s205
      %s220 = sphi 0, %s206
      %s224 = sphi 0, %s224
      %s226 = sphi 0, %s224
      %s227 = sphi 0, %s226
      %s241 = sphi 0, %s227
      %s245 = sphi 0, %s245
      %s247 = sphi 0, %s245
      %s248 = sphi 0, %s247
      %s262 = sphi 0, %s248
      %s268 = sphi 0, %s270
      %s271 = sphi 0, %s268
      %s272 = sphi 0, %s271
      %s288 = sphi 0, %s272
    $region4: #{tpu_custom_call.1} parent=1 // loop_header_branch
      %25 = sbr.rel (%p23) target = $region8
    $region5: #{tpu_custom_call.1} parent=1 // loop_body
      %s27 = ssub.s32 %s22, 1
      %s28 = ssub.s32 %s22, 2
      %s29 = sadd.s32 %s22, 1
      %s30 = ssub.s32 %s22, %s29
      %p31 = scmp.eq.s32.totalorder %s30, 0
      %s33 = sadd.s32 %s32, 1
      %s34 = scalar_select %p31, %s32, %s33
      %p37 = pneg %p31
      %p38 = scmp.eq.s32.totalorder %s22, 3
      %p39 = por %p37, %p38
      %p40 = scmp.ne.s32.totalorder %s32, %s35
      %p41 = scmp.eq.s32.totalorder %s22, 0
      %p42 = por %p40, %p41
      %p43 = scmp.ne.s32.totalorder %s32, %s35
      %p44 = scmp.eq.s32.totalorder %s27, 3
      %p45 = por %p43, %p44
      %p46 = scmp.ne.s32.totalorder %s35, %s36
      %p47 = scmp.eq.s32.totalorder %s27, 0
      %p48 = por %p46, %p47
      %p49 = scmp.ne.s32.totalorder %s35, %s36
      %p50 = scmp.eq.s32.totalorder %s28, 3
      %p51 = por %p49, %p50
      %p53 = scmp.ne.s32.totalorder %s36, %s52
      %p54 = scmp.eq.s32.totalorder %s28, 0
      %p55 = por %p53, %p54
      %s57 = sadd.s32 %s56, 1
      %p60 = scmp.eq.s32.totalorder %s22, 3
      %p61 = scmp.ne.s32.totalorder %s56, %s58
      %p62 = scmp.eq.s32.totalorder %s22, 0
      %p63 = por %p61, %p62
      %p64 = scmp.ne.s32.totalorder %s56, %s58
      %p65 = scmp.eq.s32.totalorder %s27, 3
      %p66 = por %p64, %p65
      %p67 = scmp.ne.s32.totalorder %s58, %s59
      %p68 = scmp.eq.s32.totalorder %s27, 0
      %p69 = por %p67, %p68
      %p70 = scmp.ne.s32.totalorder %s58, %s59
      %p71 = scmp.eq.s32.totalorder %s28, 3
      %p72 = por %p70, %p71
      %p74 = scmp.ne.s32.totalorder %s59, %s73
      %p75 = scmp.eq.s32.totalorder %s28, 0
      %p76 = por %p74, %p75
      %s78 = sadd.s32 %s77, 1
      %p81 = scmp.eq.s32.totalorder %s22, 3
      %p82 = scmp.ne.s32.totalorder %s77, %s79
      %p83 = scmp.eq.s32.totalorder %s22, 0
      %p84 = por %p82, %p83
      %p85 = scmp.ne.s32.totalorder %s77, %s79
      %p86 = scmp.eq.s32.totalorder %s27, 3
      %p87 = por %p85, %p86
      %p88 = scmp.ne.s32.totalorder %s79, %s80
      %p89 = scmp.eq.s32.totalorder %s27, 0
      %p90 = por %p88, %p89
      %p91 = scmp.ne.s32.totalorder %s79, %s80
      %p92 = scmp.eq.s32.totalorder %s28, 3
      %p93 = por %p91, %p92
      %p95 = scmp.ne.s32.totalorder %s80, %s94
      %p96 = scmp.eq.s32.totalorder %s28, 0
      %p97 = por %p95, %p96
      %s99 = sadd.s32 %s98, 1
      %p102 = scmp.eq.s32.totalorder %s22, 3
      %p103 = scmp.ne.s32.totalorder %s98, %s100
      %p104 = scmp.eq.s32.totalorder %s22, 0
      %p105 = por %p103, %p104
      %p106 = scmp.ne.s32.totalorder %s98, %s100
      %p107 = scmp.eq.s32.totalorder %s27, 3
      %p108 = por %p106, %p107
      %p109 = scmp.ne.s32.totalorder %s100, %s101
      %p110 = scmp.eq.s32.totalorder %s27, 0
      %p111 = por %p109, %p110
      %p112 = scmp.ne.s32.totalorder %s100, %s101
      %p113 = scmp.eq.s32.totalorder %s28, 3
      %p114 = por %p112, %p113
      %p116 = scmp.ne.s32.totalorder %s101, %s115
      %p117 = scmp.eq.s32.totalorder %s28, 0
      %p118 = por %p116, %p117
      %s120 = sadd.s32 %s119, 1
      %p123 = scmp.eq.s32.totalorder %s22, 3
      %p124 = scmp.ne.s32.totalorder %s119, %s121
      %p125 = scmp.eq.s32.totalorder %s22, 0
      %p126 = por %p124, %p125
      %p127 = scmp.ne.s32.totalorder %s119, %s121
      %p128 = scmp.eq.s32.totalorder %s27, 3
      %p129 = por %p127, %p128
      %p130 = scmp.ne.s32.totalorder %s121, %s122
      %p131 = scmp.eq.s32.totalorder %s27, 0
      %p132 = por %p130, %p131
      %p133 = scmp.ne.s32.totalorder %s121, %s122
      %p134 = scmp.eq.s32.totalorder %s28, 3
      %p135 = por %p133, %p134
      %p137 = scmp.ne.s32.totalorder %s122, %s136
      %p138 = scmp.eq.s32.totalorder %s28, 0
      %p139 = por %p137, %p138
      %s141 = sadd.s32 %s140, 1
      %p144 = scmp.eq.s32.totalorder %s22, 3
      %p145 = scmp.ne.s32.totalorder %s140, %s142
      %p146 = scmp.eq.s32.totalorder %s22, 0
      %p147 = por %p145, %p146
      %p148 = scmp.ne.s32.totalorder %s140, %s142
      %p149 = scmp.eq.s32.totalorder %s27, 3
      %p150 = por %p148, %p149
      %p151 = scmp.ne.s32.totalorder %s142, %s143
      %p152 = scmp.eq.s32.totalorder %s27, 0
      %p153 = por %p151, %p152
      %p154 = scmp.ne.s32.totalorder %s142, %s143
      %p155 = scmp.eq.s32.totalorder %s28, 3
      %p156 = por %p154, %p155
      %p158 = scmp.ne.s32.totalorder %s143, %s157
      %p159 = scmp.eq.s32.totalorder %s28, 0
      %p160 = por %p158, %p159
      %s162 = sadd.s32 %s161, 1
      %p165 = scmp.eq.s32.totalorder %s22, 3
      %p166 = scmp.ne.s32.totalorder %s161, %s163
      %p167 = scmp.eq.s32.totalorder %s22, 0
      %p168 = por %p166, %p167
      %p169 = scmp.ne.s32.totalorder %s161, %s163
      %p170 = scmp.eq.s32.totalorder %s27, 3
      %p171 = por %p169, %p170
      %p172 = scmp.ne.s32.totalorder %s163, %s164
      %p173 = scmp.eq.s32.totalorder %s27, 0
      %p174 = por %p172, %p173
      %p175 = scmp.ne.s32.totalorder %s163, %s164
      %p176 = scmp.eq.s32.totalorder %s28, 3
      %p177 = por %p175, %p176
      %p179 = scmp.ne.s32.totalorder %s164, %s178
      %p180 = scmp.eq.s32.totalorder %s28, 0
      %p181 = por %p179, %p180
      %s183 = sadd.s32 %s182, 1
      %p186 = scmp.eq.s32.totalorder %s22, 3
      %p187 = scmp.ne.s32.totalorder %s182, %s184
      %p188 = scmp.eq.s32.totalorder %s22, 0
      %p189 = por %p187, %p188
      %p190 = scmp.ne.s32.totalorder %s182, %s184
      %p191 = scmp.eq.s32.totalorder %s27, 3
      %p192 = por %p190, %p191
      %p193 = scmp.ne.s32.totalorder %s184, %s185
      %p194 = scmp.eq.s32.totalorder %s27, 0
      %p195 = por %p193, %p194
      %p196 = scmp.ne.s32.totalorder %s184, %s185
      %p197 = scmp.eq.s32.totalorder %s28, 3
      %p198 = por %p196, %p197
      %p200 = scmp.ne.s32.totalorder %s185, %s199
      %p201 = scmp.eq.s32.totalorder %s28, 0
      %p202 = por %p200, %p201
      %s204 = sadd.s32 %s203, 1
      %p207 = scmp.eq.s32.totalorder %s22, 3
      %p208 = scmp.ne.s32.totalorder %s203, %s205
      %p209 = scmp.eq.s32.totalorder %s22, 0
      %p210 = por %p208, %p209
      %p211 = scmp.ne.s32.totalorder %s203, %s205
      %p212 = scmp.eq.s32.totalorder %s27, 3
      %p213 = por %p211, %p212
      %p214 = scmp.ne.s32.totalorder %s205, %s206
      %p215 = scmp.eq.s32.totalorder %s27, 0
      %p216 = por %p214, %p215
      %p217 = scmp.ne.s32.totalorder %s205, %s206
      %p218 = scmp.eq.s32.totalorder %s28, 3
      %p219 = por %p217, %p218
      %p221 = scmp.ne.s32.totalorder %s206, %s220
      %p222 = scmp.eq.s32.totalorder %s28, 0
      %p223 = por %p221, %p222
      %s225 = sadd.s32 %s224, 1
      %p228 = scmp.eq.s32.totalorder %s22, 3
      %p229 = scmp.ne.s32.totalorder %s224, %s226
      %p230 = scmp.eq.s32.totalorder %s22, 0
      %p231 = por %p229, %p230
      %p232 = scmp.ne.s32.totalorder %s224, %s226
      %p233 = scmp.eq.s32.totalorder %s27, 3
      %p234 = por %p232, %p233
      %p235 = scmp.ne.s32.totalorder %s226, %s227
      %p236 = scmp.eq.s32.totalorder %s27, 0
      %p237 = por %p235, %p236
      %p238 = scmp.ne.s32.totalorder %s226, %s227
      %p239 = scmp.eq.s32.totalorder %s28, 3
      %p240 = por %p238, %p239
      %p242 = scmp.ne.s32.totalorder %s227, %s241
      %p243 = scmp.eq.s32.totalorder %s28, 0
      %p244 = por %p242, %p243
      %s246 = sadd.s32 %s245, 1
      %p249 = scmp.eq.s32.totalorder %s22, 3
      %p250 = scmp.ne.s32.totalorder %s245, %s247
      %p251 = scmp.eq.s32.totalorder %s22, 0
      %p252 = por %p250, %p251
      %p253 = scmp.ne.s32.totalorder %s245, %s247
      %p254 = scmp.eq.s32.totalorder %s27, 3
      %p255 = por %p253, %p254
      %p256 = scmp.ne.s32.totalorder %s247, %s248
      %p257 = scmp.eq.s32.totalorder %s27, 0
      %p258 = por %p256, %p257
      %p259 = scmp.ne.s32.totalorder %s247, %s248
      %p260 = scmp.eq.s32.totalorder %s28, 3
      %p261 = por %p259, %p260
      %p263 = scmp.ne.s32.totalorder %s248, %s262
      %p264 = scmp.eq.s32.totalorder %s28, 0
      %p265 = por %p263, %p264
      %s266 = ssub.s32 %s22, %s29
      %p267 = scmp.eq.s32.totalorder %s266, 0
      %s269 = sadd.s32 %s268, 1
      %s270 = scalar_select %p267, %s268, %s269
      %p273 = pneg %p267
      %p274 = scmp.eq.s32.totalorder %s22, 3
      %p275 = por %p273, %p274
      %p276 = scmp.ne.s32.totalorder %s268, %s271
      %p277 = scmp.eq.s32.totalorder %s22, 0
      %p278 = por %p276, %p277
      %p279 = scmp.ne.s32.totalorder %s268, %s271
      %p280 = scmp.eq.s32.totalorder %s27, 3
      %p281 = por %p279, %p280
      %p282 = scmp.ne.s32.totalorder %s271, %s272
      %p283 = scmp.eq.s32.totalorder %s27, 0
      %p284 = por %p282, %p283
      %p285 = scmp.ne.s32.totalorder %s271, %s272
      %p286 = scmp.eq.s32.totalorder %s28, 3
      %p287 = por %p285, %p286
      %p289 = scmp.ne.s32.totalorder %s272, %s288
      %p290 = scmp.eq.s32.totalorder %s28, 0
      %p291 = por %p289, %p290
      %p292 = scmp.le.s32.totalorder 1, %s22
      %p293 = scmp.lt.s32.totalorder %s22, 5
      %p294 = pnand %p292, %p293
      %p295 = pneg %p294
      // Predicated region
      $region9: #{tpu_custom_call.1} parent=5 // pred_check
        _
      $region10: #{tpu_custom_call.1} parent=5 // pred_check_branch
        %297 = sbr.rel (%p294) target = $region12
      $region11: #{tpu_custom_call.1} parent=5 // pred_region
        %s298 = ssub.s32 %s22, 1
        // Predicated region
        $region13: #{tpu_custom_call.1} parent=11 // pred_check
          %p299 = pneg %p69
        $region14: #{tpu_custom_call.1} parent=11 // pred_check_branch
          %301 = sbr.rel (%p299) target = $region16
        $region15: #{tpu_custom_call.1} parent=11 // pred_region
          _
        $region16: #{tpu_custom_call.1} parent=11 // pred_fallthru
          _
        // Predicated region
        $region17: #{tpu_custom_call.1} parent=11 // pred_check
          %p302 = pneg %p90
        $region18: #{tpu_custom_call.1} parent=11 // pred_check_branch
          %304 = sbr.rel (%p302) target = $region20
        $region19: #{tpu_custom_call.1} parent=11 // pred_region
          _
        $region20: #{tpu_custom_call.1} parent=11 // pred_fallthru
          _
        // Predicated region
        $region21: #{tpu_custom_call.1} parent=11 // pred_check
          %p305 = pneg %p111
        $region22: #{tpu_custom_call.1} parent=11 // pred_check_branch
          %307 = sbr.rel (%p305) target = $region24
        $region23: #{tpu_custom_call.1} parent=11 // pred_region
          _
        $region24: #{tpu_custom_call.1} parent=11 // pred_fallthru
          _
        // Predicated region
        $region25: #{tpu_custom_call.1} parent=11 // pred_check
          %p308 = pneg %p132
        $region26: #{tpu_custom_call.1} parent=11 // pred_check_branch
          %310 = sbr.rel (%p308) target = $region28
        $region27: #{tpu_custom_call.1} parent=11 // pred_region
          _
        $region28: #{tpu_custom_call.1} parent=11 // pred_fallthru
          _
        // Predicated region
        $region29: #{tpu_custom_call.1} parent=11 // pred_check
          %p311 = pneg %p153
        $region30: #{tpu_custom_call.1} parent=11 // pred_check_branch
          %313 = sbr.rel (%p311) target = $region32
        $region31: #{tpu_custom_call.1} parent=11 // pred_region
          _
        $region32: #{tpu_custom_call.1} parent=11 // pred_fallthru
          _
        // Predicated region
        $region33: #{tpu_custom_call.1} parent=11 // pred_check
          %p314 = pneg %p174
        $region34: #{tpu_custom_call.1} parent=11 // pred_check_branch
          %316 = sbr.rel (%p314) target = $region36
        $region35: #{tpu_custom_call.1} parent=11 // pred_region
          _
        $region36: #{tpu_custom_call.1} parent=11 // pred_fallthru
          _
        // Predicated region
        $region37: #{tpu_custom_call.1} parent=11 // pred_check
          %p317 = pneg %p195
        $region38: #{tpu_custom_call.1} parent=11 // pred_check_branch
          %319 = sbr.rel (%p317) target = $region40
        $region39: #{tpu_custom_call.1} parent=11 // pred_region
          _
        $region40: #{tpu_custom_call.1} parent=11 // pred_fallthru
          _
        // Predicated region
        $region41: #{tpu_custom_call.1} parent=11 // pred_check
          %p320 = pneg %p216
        $region42: #{tpu_custom_call.1} parent=11 // pred_check_branch
          %322 = sbr.rel (%p320) target = $region44
        $region43: #{tpu_custom_call.1} parent=11 // pred_region
          _
        $region44: #{tpu_custom_call.1} parent=11 // pred_fallthru
          _
        // Predicated region
        $region45: #{tpu_custom_call.1} parent=11 // pred_check
          %p323 = pneg %p237
        $region46: #{tpu_custom_call.1} parent=11 // pred_check_branch
          %325 = sbr.rel (%p323) target = $region48
        $region47: #{tpu_custom_call.1} parent=11 // pred_region
          _
        $region48: #{tpu_custom_call.1} parent=11 // pred_fallthru
          _
        // Predicated region
        $region49: #{tpu_custom_call.1} parent=11 // pred_check
          %p326 = pneg %p258
        $region50: #{tpu_custom_call.1} parent=11 // pred_check_branch
          %328 = sbr.rel (%p326) target = $region52
        $region51: #{tpu_custom_call.1} parent=11 // pred_region
          _
        $region52: #{tpu_custom_call.1} parent=11 // pred_fallthru
          _
      $region12: #{tpu_custom_call.1} parent=5 // pred_fallthru
        _
      %p329 = scmp.lt.s32.totalorder %s22, 4
      // Predicated region
      $region53: #{tpu_custom_call.1} parent=5 // pred_check
        %p330 = pneg %p329
      $region54: #{tpu_custom_call.1} parent=5 // pred_check_branch
        %332 = sbr.rel (%p330) target = $region56
      $region55: #{tpu_custom_call.1} parent=5 // pred_region
        // Predicated region
        $region57: #{tpu_custom_call.1} parent=55 // pred_check
          %p333 = pneg %p42
        $region58: #{tpu_custom_call.1} parent=55 // pred_check_branch
          %335 = sbr.rel (%p333) target = $region60
        $region59: #{tpu_custom_call.1} parent=55 // pred_region
          %s336 = smul.u32 16, %s22
          %p337 = scmp.lt.s32.totalorder %s336, 63
          %s338 = scalar_select %p337, %s336, 63
          %s339 = smul.addr %s338, 8
          %s340 = scalar_lea.vmem %s0, %s339
          %s341 = smul.u32 16, %s22
        $region60: #{tpu_custom_call.1} parent=55 // pred_fallthru
          _
      $region56: #{tpu_custom_call.1} parent=5 // pred_fallthru
        _
      %p342 = scmp.le.s32.totalorder 1, %s22
      %p343 = scmp.lt.s32.totalorder %s22, 5
      %p344 = pnand %p342, %p343
      %p345 = pneg %p344
      // Predicated region
      $region61: #{tpu_custom_call.1} parent=5 // pred_check
        _
      $region62: #{tpu_custom_call.1} parent=5 // pred_check_branch
        %347 = sbr.rel (%p344) target = $region64
      $region63: #{tpu_custom_call.1} parent=5 // pred_region
        %s348 = ssub.s32 %s22, 1
        %s349 = smul.u32 16, %s27
        %p350 = scmp.lt.s32.totalorder %s349, 63
        %s351 = scalar_select %p350, %s349, 63
        %s352 = smul.addr %s351, 8
        %s353 = scalar_lea.vmem %s0, %s352
        %p354 = pneg %p48
        %p355 = pneg %p45
        %p356 = pneg %p69
        %p357 = pneg %p66
        %p358 = pneg %p90
        %p359 = pneg %p87
        %p360 = pneg %p111
        %p361 = pneg %p108
        %p362 = pneg %p132
        %p363 = pneg %p129
        %p364 = pneg %p153
        %p365 = pneg %p150
        %p366 = pneg %p174
        %p367 = pneg %p171
        %p368 = pneg %p195
        %p369 = pneg %p192
        %p370 = pneg %p216
        %p371 = pneg %p213
        %p372 = pneg %p237
        %p373 = pneg %p234
        %p374 = pneg %p258
        %p375 = pneg %p255
        %p376 = pneg %p284
        %p377 = pneg %p281
        %s378 = sand.u32 %s271, 1
        %s379 = scalar_lea.sflag [#allocation4], %s378
        %s380 = sand.u32 %s271, 1
        %s381 = scalar_lea.vmem [#allocation3], %s380
        %s382 = smul.u32 16, %s27
        %p383 = scmp.lt.s32.totalorder %s382, 63
        %s384 = scalar_select %p383, %s382, 63
        %s385 = smul.addr %s384, 8
        %s386 = scalar_lea.vmem %s0, %s385
        %s387 = smul.u32 16, %s27
        %v388 = vld [vmem:[%s386] sm:$0xff]
        %v389 = vld [vmem:[%s386 + $0x8] sm:$0xff]
        %v390 = vld [vmem:[%s386 + $0x10] sm:$0xff]
        %v391 = vld [vmem:[%s386 + $0x18] sm:$0xff]
        %v392 = vld [vmem:[%s386 + $0x20] sm:$0xff]
        %v393 = vld [vmem:[%s386 + $0x28] sm:$0xff]
        %v394 = vld [vmem:[%s386 + $0x30] sm:$0xff]
        %v395 = vld [vmem:[%s386 + $0x38] sm:$0xff]
        %v396 = vld [vmem:[%s386 + $0x40] sm:$0xff]
        %v397 = vld [vmem:[%s386 + $0x48] sm:$0xff]
        %v398 = vld [vmem:[%s386 + $0x50] sm:$0xff]
        %v399 = vld [vmem:[%s386 + $0x58] sm:$0xff]
        %v400 = vld [vmem:[%s386 + $0x60] sm:$0xff]
        %v401 = vld [vmem:[%s386 + $0x68] sm:$0xff]
        %v402 = vld [vmem:[%s386 + $0x70] sm:$0xff]
        %v403 = vld [vmem:[%s386 + $0x78] sm:$0xff]
        %v404 = vld [vmem:[%s1] sm:$0xff]
        %v405 = vld [vmem:[%s1 + $0x8] sm:$0xff]
        %v406 = vld [vmem:[%s1 + $0x10] sm:$0xff]
        %v407 = vld [vmem:[%s1 + $0x18] sm:$0xff]
        %v408 = vld [vmem:[%s1 + $0x20] sm:$0xff]
        %v409 = vld [vmem:[%s1 + $0x28] sm:$0xff]
        %v410 = vld [vmem:[%s1 + $0x30] sm:$0xff]
        %v411 = vld [vmem:[%s1 + $0x38] sm:$0xff]
        %v412 = vld [vmem:[%s1 + $0x40] sm:$0xff]
        %v413 = vld [vmem:[%s1 + $0x48] sm:$0x3f]
        %v414 = vld [vmem:[%s6] sm:$0x1]
        %v416 = vlaneseq
        %v417 = vshrl.u32 %v416, 7
        %v418 = vsub.s32 0, %v417
        %v419 = vrot.slane %v414, %v418
        %vm421 = vcmask 637952
        %v423 = vsel %vm421, %v388, 0
        %v426 = vsel %vm421, %v389, 0
        %v429 = vsel %vm421, %v390, 0
        %v432 = vsel %vm421, %v391, 0
        %v435 = vsel %vm421, %v392, 0
        %v438 = vsel %vm421, %v393, 0
        %v441 = vsel %vm421, %v394, 0
        %v444 = vsel %vm421, %v395, 0
        %v447 = vsel %vm421, %v396, 0
        %v450 = vsel %vm421, %v397, 0
        %v453 = vsel %vm421, %v398, 0
        %v456 = vsel %vm421, %v399, 0
        %v459 = vsel %vm421, %v400, 0
        %v462 = vsel %vm421, %v401, 0
        %v465 = vsel %vm421, %v402, 0
        %v468 = vsel %vm421, %v403, 0
        %vm470 = vcmask 1045504
        %v472 = vsel %vm470, %v413, 0
        %474 = vmatprep.subr.mxu0 0.0
        %475 = vmatpush1.msra.mxu0 %v404
        %476 = vmatprep.subr.mxu0 0.0
        %477 = vmatpush1.msra.mxu0 %v405
        %478 = vmatprep.subr.mxu0 0.0
        %479 = vmatpush1.msra.mxu0 %v406
        %480 = vmatprep.subr.mxu0 0.0
        %481 = vmatpush1.msra.mxu0 %v407
        %482 = vmatprep.subr.mxu0 0.0
        %483 = vmatpush1.msra.mxu0 %v408
        %484 = vmatprep.subr.mxu0 0.0
        %485 = vmatpush1.msra.mxu0 %v409
        %486 = vmatprep.subr.mxu0 0.0
        %487 = vmatpush1.msra.mxu0 %v410
        %488 = vmatprep.subr.mxu0 0.0
        %489 = vmatpush1.msra.mxu0 %v411
        %490 = vmatprep.subr.mxu0 0.0
        %491 = vmatpush1.msra.mxu0 %v412
        %492 = vmatprep.subr.mxu0 0.0
        %493 = vmatpush1.msra.mxu0 %v472
        %494 = vmatprep.subr.mxu0 0.0
        %495 = vmatpush1.msra.mxu0 0.0
        %496 = vmatprep.subr.mxu0 0.0
        %497 = vmatpush1.msra.mxu0 0.0
        %498 = vmatprep.subr.mxu0 0.0
        %499 = vmatpush1.msra.mxu0 0.0
        %500 = vmatprep.subr.mxu0 0.0
        %501 = vmatpush1.msra.mxu0 0.0
        %502 = vmatprep.subr.mxu0 0.0
        %503 = vmatpush1.msra.mxu0 0.0
        %504 = vmatprep.subr.mxu0 0.0
        %505 = vmatpush1.msra.mxu0 0.0
        %506 = vmatprep.subr.mxu0 0.0
        %507 = vmatpush1.msra.mxu0 0.0
        %508 = vmatprep.subr.mxu0 0.0
        %509 = vmatpush1.msra.mxu0 0.0
        %510 = vmatprep.subr.mxu0 0.0
        %511 = vmatpush1.msra.mxu0 0.0
        %512 = vmatprep.subr.mxu0 0.0
        %513 = vmatpush1.msra.mxu0 0.0
        %514 = vmatprep.subr.mxu0 0.0
        %515 = vmatpush1.msra.mxu0 0.0
        %516 = vmatprep.subr.mxu0 0.0
        %517 = vmatpush1.msra.mxu0 0.0
        %518 = vmatprep.subr.mxu0 0.0
        %519 = vmatpush1.msra.mxu0 0.0
        %520 = vmatprep.subr.mxu0 0.0
        %521 = vmatpush1.msra.mxu0 0.0
        %522 = vmatprep.subr.mxu0 0.0
        %523 = vmatpush1.msra.mxu0 0.0
        %524 = vmatprep.subr.mxu0 0.0
        %525 = vmatpush1.msra.mxu0 0.0
        %526 = vmatprep.subr.mxu0 0.0
        %527 = vmatpush1.msra.mxu0 0.0
        %528 = vmatprep.subr.mxu0 0.0
        %529 = vmatpush1.msra.mxu0 0.0
        %530 = vmatprep.subr.mxu0 0.0
        %531 = vmatpush1.msra.mxu0 0.0
        %532 = vmatprep.subr.mxu0 0.0
        %533 = vmatpush1.msra.mxu0 0.0
        %534 = vmatprep.subr.mxu0 0.0
        %535 = vmatpush1.msra.mxu0 0.0
        %536 = vmatprep.subr.mxu0 0.0
        %537 = vmatpush1.msra.mxu0 0.0
        %538 = vmatprep.mubr.f32.mxu0 0.0
        %539 = vmatmul.mubr.f32.gmra.mrb[0].mxu0 %v423
        %v540 = vpop.f32.mrb[0].mxu0
        %v541 = vadd.f32 %v419, %v540
        %v542 = vpop.f32.mrb[0].mxu0
        %543 = vmatprep.mubr.f32.mxu0 0.0
        %544 = vmatmul.mubr.f32.gmra.mrb[0].mxu0 %v426
        %v545 = vpop.f32.mrb[0].mxu0
        %v546 = vadd.f32 %v419, %v545
        %v547 = vpop.f32.mrb[0].mxu0
        %548 = vmatprep.mubr.f32.mxu0 0.0
        %549 = vmatmul.mubr.f32.gmra.mrb[0].mxu0 %v429
        %v550 = vpop.f32.mrb[0].mxu0
        %v551 = vadd.f32 %v419, %v550
        %v552 = vpop.f32.mrb[0].mxu0
        %553 = vmatprep.mubr.f32.mxu0 0.0
        %554 = vmatmul.mubr.f32.gmra.mrb[0].mxu0 %v432
        %v555 = vpop.f32.mrb[0].mxu0
        %v556 = vadd.f32 %v419, %v555
        %v557 = vpop.f32.mrb[0].mxu0
        %558 = vmatprep.mubr.f32.mxu0 0.0
        %559 = vmatmul.mubr.f32.gmra.mrb[0].mxu0 %v435
        %v560 = vpop.f32.mrb[0].mxu0
        %v561 = vadd.f32 %v419, %v560
        %v562 = vpop.f32.mrb[0].mxu0
        %563 = vmatprep.mubr.f32.mxu0 0.0
        %564 = vmatmul.mubr.f32.gmra.mrb[0].mxu0 %v438
        %v565 = vpop.f32.mrb[0].mxu0
        %v566 = vadd.f32 %v419, %v565
        %v567 = vpop.f32.mrb[0].mxu0
        %568 = vmatprep.mubr.f32.mxu0 0.0
        %569 = vmatmul.mubr.f32.gmra.mrb[0].mxu0 %v441
        %v570 = vpop.f32.mrb[0].mxu0
        %v571 = vadd.f32 %v419, %v570
        %v572 = vpop.f32.mrb[0].mxu0
        %573 = vmatprep.mubr.f32.mxu0 0.0
        %574 = vmatmul.mubr.f32.gmra.mrb[0].mxu0 %v444
        %v575 = vpop.f32.mrb[0].mxu0
        %v576 = vadd.f32 %v419, %v575
        %v577 = vpop.f32.mrb[0].mxu0
        %578 = vmatprep.mubr.f32.mxu0 0.0
        %579 = vmatmul.mubr.f32.gmra.mrb[0].mxu0 %v447
        %v580 = vpop.f32.mrb[0].mxu0
        %v581 = vadd.f32 %v419, %v580
        %v582 = vpop.f32.mrb[0].mxu0
        %583 = vmatprep.mubr.f32.mxu0 0.0
        %584 = vmatmul.mubr.f32.gmra.mrb[0].mxu0 %v450
        %v585 = vpop.f32.mrb[0].mxu0
        %v586 = vadd.f32 %v419, %v585
        %v587 = vpop.f32.mrb[0].mxu0
        %588 = vmatprep.mubr.f32.mxu0 0.0
        %589 = vmatmul.mubr.f32.gmra.mrb[0].mxu0 %v453
        %v590 = vpop.f32.mrb[0].mxu0
        %v591 = vadd.f32 %v419, %v590
        %v592 = vpop.f32.mrb[0].mxu0
        %593 = vmatprep.mubr.f32.mxu0 0.0
        %594 = vmatmul.mubr.f32.gmra.mrb[0].mxu0 %v456
        %v595 = vpop.f32.mrb[0].mxu0
        %v596 = vadd.f32 %v419, %v595
        %v597 = vpop.f32.mrb[0].mxu0
        %598 = vmatprep.mubr.f32.mxu0 0.0
        %599 = vmatmul.mubr.f32.gmra.mrb[0].mxu0 %v459
        %v600 = vpop.f32.mrb[0].mxu0
        %v601 = vadd.f32 %v419, %v600
        %v602 = vpop.f32.mrb[0].mxu0
        %603 = vmatprep.mubr.f32.mxu0 0.0
        %604 = vmatmul.mubr.f32.gmra.mrb[0].mxu0 %v462
        %v605 = vpop.f32.mrb[0].mxu0
        %v606 = vadd.f32 %v419, %v605
        %v607 = vpop.f32.mrb[0].mxu0
        %608 = vmatprep.mubr.f32.mxu0 0.0
        %609 = vmatmul.mubr.f32.gmra.mrb[0].mxu0 %v465
        %v610 = vpop.f32.mrb[0].mxu0
        %v611 = vadd.f32 %v419, %v610
        %v612 = vpop.f32.mrb[0].mxu0
        %613 = vmatprep.mubr.f32.mxu0 0.0
        %614 = vmatmul.mubr.f32.gmra.mrb[0].mxu0 %v468
        %v615 = vpop.f32.mrb[0].mxu0
        %v616 = vadd.f32 %v419, %v615
        %v617 = vpop.f32.mrb[0].mxu0
        %618 = vdwg.mxu0
        %v619 = vmax.f32 %v541, 0.0
        %v620 = vmax.f32 %v546, 0.0
        %v621 = vmax.f32 %v551, 0.0
        %v622 = vmax.f32 %v556, 0.0
        %v623 = vmax.f32 %v561, 0.0
        %v624 = vmax.f32 %v566, 0.0
        %v625 = vmax.f32 %v571, 0.0
        %v626 = vmax.f32 %v576, 0.0
        %v627 = vmax.f32 %v581, 0.0
        %v628 = vmax.f32 %v586, 0.0
        %v629 = vmax.f32 %v591, 0.0
        %v630 = vmax.f32 %v596, 0.0
        %v631 = vmax.f32 %v601, 0.0
        %v632 = vmax.f32 %v606, 0.0
        %v633 = vmax.f32 %v611, 0.0
        %v634 = vmax.f32 %v616, 0.0
        %v635 = vld [vmem:[%s2] sm:$0xff]
        %v636 = vld [vmem:[%s2 + $0x8] sm:$0xff]
        %v637 = vld [vmem:[%s2 + $0x10] sm:$0xff]
        %v638 = vld [vmem:[%s2 + $0x18] sm:$0xff]
        %v639 = vld [vmem:[%s2 + $0x20] sm:$0xff]
        %v640 = vld [vmem:[%s2 + $0x28] sm:$0xff]
        %v641 = vld [vmem:[%s2 + $0x30] sm:$0xff]
        %v642 = vld [vmem:[%s2 + $0x38] sm:$0xff]
        %v643 = vld [vmem:[%s7] sm:$0x1]
        %v645 = vlaneseq
        %v646 = vshrl.u32 %v645, 7
        %v647 = vsub.s32 0, %v646
        %v648 = vrot.slane %v643, %v647
        %vm650 = vcmask 523264
        %v652 = vsel %vm650, %v619, 0
        %v655 = vsel %vm650, %v620, 0
        %v658 = vsel %vm650, %v621, 0
        %v661 = vsel %vm650, %v622, 0
        %v664 = vsel %vm650, %v623, 0
        %v667 = vsel %vm650, %v624, 0
        %v670 = vsel %vm650, %v625, 0
        %v673 = vsel %vm650, %v626, 0
        %v676 = vsel %vm650, %v627, 0
        %v679 = vsel %vm650, %v628, 0
        %v682 = vsel %vm650, %v629, 0
        %v685 = vsel %vm650, %v630, 0
        %v688 = vsel %vm650, %v631, 0
        %v691 = vsel %vm650, %v632, 0
        %v694 = vsel %vm650, %v633, 0
        %v697 = vsel %vm650, %v634, 0
        %699 = vmatprep.subr.mxu0 0.0
        %700 = vmatpush1.msra.mxu0 %v635
        %701 = vmatprep.subr.mxu0 0.0
        %702 = vmatpush1.msra.mxu0 %v636
        %703 = vmatprep.subr.mxu0 0.0
        %704 = vmatpush1.msra.mxu0 %v637
        %705 = vmatprep.subr.mxu0 0.0
        %706 = vmatpush1.msra.mxu0 %v638
        %707 = vmatprep.subr.mxu0 0.0
        %708 = vmatpush1.msra.mxu0 %v639
        %709 = vmatprep.subr.mxu0 0.0
        %710 = vmatpush1.msra.mxu0 %v640
        %711 = vmatprep.subr.mxu0 0.0
        %712 = vmatpush1.msra.mxu0 %v641
        %713 = vmatprep.subr.mxu0 0.0
        %714 = vmatpush1.msra.mxu0 %v642
        %715 = vmatprep.subr.mxu0 0.0
        %716 = vmatpush1.msra.mxu0 0.0
        %717 = vmatprep.subr.mxu0 0.0
        %718 = vmatpush1.msra.mxu0 0.0
        %719 = vmatprep.subr.mxu0 0.0
        %720 = vmatpush1.msra.mxu0 0.0
        %721 = vmatprep.subr.mxu0 0.0
        %722 = vmatpush1.msra.mxu0 0.0
        %723 = vmatprep.subr.mxu0 0.0
        %724 = vmatpush1.msra.mxu0 0.0
        %725 = vmatprep.subr.mxu0 0.0
        %726 = vmatpush1.msra.mxu0 0.0
        %727 = vmatprep.subr.mxu0 0.0
        %728 = vmatpush1.msra.mxu0 0.0
        %729 = vmatprep.subr.mxu0 0.0
        %730 = vmatpush1.msra.mxu0 0.0
        %731 = vmatprep.subr.mxu0 0.0
        %732 = vmatpush1.msra.mxu0 0.0
        %733 = vmatprep.subr.mxu0 0.0
        %734 = vmatpush1.msra.mxu0 0.0
        %735 = vmatprep.subr.mxu0 0.0
        %736 = vmatpush1.msra.mxu0 0.0
        %737 = vmatprep.subr.mxu0 0.0
        %738 = vmatpush1.msra.mxu0 0.0
        %739 = vmatprep.subr.mxu0 0.0
        %740 = vmatpush1.msra.mxu0 0.0
        %741 = vmatprep.subr.mxu0 0.0
        %742 = vmatpush1.msra.mxu0 0.0
        %743 = vmatprep.subr.mxu0 0.0
        %744 = vmatpush1.msra.mxu0 0.0
        %745 = vmatprep.subr.mxu0 0.0
        %746 = vmatpush1.msra.mxu0 0.0
        %747 = vmatprep.subr.mxu0 0.0
        %748 = vmatpush1.msra.mxu0 0.0
        %749 = vmatprep.subr.mxu0 0.0
        %750 = vmatpush1.msra.mxu0 0.0
        %751 = vmatprep.subr.mxu0 0.0
        %752 = vmatpush1.msra.mxu0 0.0
        %753 = vmatprep.subr.mxu0 0.0
        %754 = vmatpush1.msra.mxu0 0.0
        %755 = vmatprep.subr.mxu0 0.0
        %756 = vmatpush1.msra.mxu0 0.0
        %757 = vmatprep.subr.mxu0 0.0
        %758 = vmatpush1.msra.mxu0 0.0
        %759 = vmatprep.subr.mxu0 0.0
        %760 = vmatpush1.msra.mxu0 0.0
        %761 = vmatprep.subr.mxu0 0.0
        %762 = vmatpush1.msra.mxu0 0.0
        %763 = vmatprep.mubr.f32.mxu0 0.0
        %764 = vmatmul.mubr.f32.gmra.mrb[0].mxu0 %v652
        %v765 = vpop.f32.mrb[0].mxu0
        %v766 = vadd.f32 %v648, %v765
        %v767 = vpop.f32.mrb[0].mxu0
        %768 = vmatprep.mubr.f32.mxu0 0.0
        %769 = vmatmul.mubr.f32.gmra.mrb[0].mxu0 %v655
        %v770 = vpop.f32.mrb[0].mxu0
        %v771 = vadd.f32 %v648, %v770
        %v772 = vpop.f32.mrb[0].mxu0
        %773 = vmatprep.mubr.f32.mxu0 0.0
        %774 = vmatmul.mubr.f32.gmra.mrb[0].mxu0 %v658
        %v775 = vpop.f32.mrb[0].mxu0
        %v776 = vadd.f32 %v648, %v775
        %v777 = vpop.f32.mrb[0].mxu0
        %778 = vmatprep.mubr.f32.mxu0 0.0
        %779 = vmatmul.mubr.f32.gmra.mrb[0].mxu0 %v661
        %v780 = vpop.f32.mrb[0].mxu0
        %v781 = vadd.f32 %v648, %v780
        %v782 = vpop.f32.mrb[0].mxu0
        %783 = vmatprep.mubr.f32.mxu0 0.0
        %784 = vmatmul.mubr.f32.gmra.mrb[0].mxu0 %v664
        %v785 = vpop.f32.mrb[0].mxu0
        %v786 = vadd.f32 %v648, %v785
        %v787 = vpop.f32.mrb[0].mxu0
        %788 = vmatprep.mubr.f32.mxu0 0.0
        %789 = vmatmul.mubr.f32.gmra.mrb[0].mxu0 %v667
        %v790 = vpop.f32.mrb[0].mxu0
        %v791 = vadd.f32 %v648, %v790
        %v792 = vpop.f32.mrb[0].mxu0
        %793 = vmatprep.mubr.f32.mxu0 0.0
        %794 = vmatmul.mubr.f32.gmra.mrb[0].mxu0 %v670
        %v795 = vpop.f32.mrb[0].mxu0
        %v796 = vadd.f32 %v648, %v795
        %v797 = vpop.f32.mrb[0].mxu0
        %798 = vmatprep.mubr.f32.mxu0 0.0
        %799 = vmatmul.mubr.f32.gmra.mrb[0].mxu0 %v673
        %v800 = vpop.f32.mrb[0].mxu0
        %v801 = vadd.f32 %v648, %v800
        %v802 = vpop.f32.mrb[0].mxu0
        %803 = vmatprep.mubr.f32.mxu0 0.0
        %804 = vmatmul.mubr.f32.gmra.mrb[0].mxu0 %v676
        %v805 = vpop.f32.mrb[0].mxu0
        %v806 = vadd.f32 %v648, %v805
        %v807 = vpop.f32.mrb[0].mxu0
        %808 = vmatprep.mubr.f32.mxu0 0.0
        %809 = vmatmul.mubr.f32.gmra.mrb[0].mxu0 %v679
        %v810 = vpop.f32.mrb[0].mxu0
        %v811 = vadd.f32 %v648, %v810
        %v812 = vpop.f32.mrb[0].mxu0
        %813 = vmatprep.mubr.f32.mxu0 0.0
        %814 = vmatmul.mubr.f32.gmra.mrb[0].mxu0 %v682
        %v815 = vpop.f32.mrb[0].mxu0
        %v816 = vadd.f32 %v648, %v815
        %v817 = vpop.f32.mrb[0].mxu0
        %818 = vmatprep.mubr.f32.mxu0 0.0
        %819 = vmatmul.mubr.f32.gmra.mrb[0].mxu0 %v685
        %v820 = vpop.f32.mrb[0].mxu0
        %v821 = vadd.f32 %v648, %v820
        %v822 = vpop.f32.mrb[0].mxu0
        %823 = vmatprep.mubr.f32.mxu0 0.0
        %824 = vmatmul.mubr.f32.gmra.mrb[0].mxu0 %v688
        %v825 = vpop.f32.mrb[0].mxu0
        %v826 = vadd.f32 %v648, %v825
        %v827 = vpop.f32.mrb[0].mxu0
        %828 = vmatprep.mubr.f32.mxu0 0.0
        %829 = vmatmul.mubr.f32.gmra.mrb[0].mxu0 %v691
        %v830 = vpop.f32.mrb[0].mxu0
        %v831 = vadd.f32 %v648, %v830
        %v832 = vpop.f32.mrb[0].mxu0
        %833 = vmatprep.mubr.f32.mxu0 0.0
        %834 = vmatmul.mubr.f32.gmra.mrb[0].mxu0 %v694
        %v835 = vpop.f32.mrb[0].mxu0
        %v836 = vadd.f32 %v648, %v835
        %v837 = vpop.f32.mrb[0].mxu0
        %838 = vmatprep.mubr.f32.mxu0 0.0
        %839 = vmatmul.mubr.f32.gmra.mrb[0].mxu0 %v697
        %v840 = vpop.f32.mrb[0].mxu0
        %v841 = vadd.f32 %v648, %v840
        %v842 = vpop.f32.mrb[0].mxu0
        %843 = vdwg.mxu0
        %v844 = vmax.f32 %v766, 0.0
        %v845 = vmax.f32 %v771, 0.0
        %v846 = vmax.f32 %v776, 0.0
        %v847 = vmax.f32 %v781, 0.0
        %v848 = vmax.f32 %v786, 0.0
        %v849 = vmax.f32 %v791, 0.0
        %v850 = vmax.f32 %v796, 0.0
        %v851 = vmax.f32 %v801, 0.0
        %v852 = vmax.f32 %v806, 0.0
        %v853 = vmax.f32 %v811, 0.0
        %v854 = vmax.f32 %v816, 0.0
        %v855 = vmax.f32 %v821, 0.0
        %v856 = vmax.f32 %v826, 0.0
        %v857 = vmax.f32 %v831, 0.0
        %v858 = vmax.f32 %v836, 0.0
        %v859 = vmax.f32 %v841, 0.0
        %v860 = vld [vmem:[%s3] sm:$0xff]
        %v861 = vld [vmem:[%s3 + $0x8] sm:$0xff]
        %v862 = vld [vmem:[%s8] sm:$0xff]
        %v863 = vld [vmem:[%s8 + $0x8] sm:$0xff]
        %865 = vset.pattern.permute.xlu0 0
        %866 = vperm.xlu0 %865, %v862
        %v867 = vpop.permute.xlu0 %866
        %870 = vset.pattern.permute.xlu0 0
        %871 = vperm.xlu0 %870, %v863
        %v872 = vpop.permute.xlu0 %871
        %vm874 = vcmask 261120
        %v876 = vsel %vm874, %v860, 0
        %v879 = vsel %vm874, %v861, 0
        %v882 = vsel %vm874, %v844, 0
        %v885 = vsel %vm874, %v845, 0
        %v888 = vsel %vm874, %v846, 0
        %v891 = vsel %vm874, %v847, 0
        %v894 = vsel %vm874, %v848, 0
        %v897 = vsel %vm874, %v849, 0
        %v900 = vsel %vm874, %v850, 0
        %v903 = vsel %vm874, %v851, 0
        %v906 = vsel %vm874, %v852, 0
        %v909 = vsel %vm874, %v853, 0
        %v912 = vsel %vm874, %v854, 0
        %v915 = vsel %vm874, %v855, 0
        %v918 = vsel %vm874, %v856, 0
        %v921 = vsel %vm874, %v857, 0
        %v924 = vsel %vm874, %v858, 0
        %v927 = vsel %vm874, %v859, 0
        %929 = vmatprep.subr.mxu0 0.0
        %930 = vmatpush1.xpose.msra.mxu0 %v882
        %931 = vmatprep.subr.mxu0 0.0
        %932 = vmatpush1.xpose.msra.mxu0 %v885
        %933 = vmatprep.subr.mxu0 0.0
        %934 = vmatpush1.xpose.msra.mxu0 %v888
        %935 = vmatprep.subr.mxu0 0.0
        %936 = vmatpush1.xpose.msra.mxu0 %v891
        %937 = vmatprep.subr.mxu0 0.0
        %938 = vmatpush1.xpose.msra.mxu0 %v894
        %939 = vmatprep.subr.mxu0 0.0
        %940 = vmatpush1.xpose.msra.mxu0 %v897
        %941 = vmatprep.subr.mxu0 0.0
        %942 = vmatpush1.xpose.msra.mxu0 %v900
        %943 = vmatprep.subr.mxu0 0.0
        %944 = vmatpush1.xpose.msra.mxu0 %v903
        %945 = vmatprep.subr.mxu0 0.0
        %946 = vmatpush1.xpose.msra.mxu0 %v906
        %947 = vmatprep.subr.mxu0 0.0
        %948 = vmatpush1.xpose.msra.mxu0 %v909
        %949 = vmatprep.subr.mxu0 0.0
        %950 = vmatpush1.xpose.msra.mxu0 %v912
        %951 = vmatprep.subr.mxu0 0.0
        %952 = vmatpush1.xpose.msra.mxu0 %v915
        %953 = vmatprep.subr.mxu0 0.0
        %954 = vmatpush1.xpose.msra.mxu0 %v918
        %955 = vmatprep.subr.mxu0 0.0
        %956 = vmatpush1.xpose.msra.mxu0 %v921
        %957 = vmatprep.subr.mxu0 0.0
        %958 = vmatpush1.xpose.msra.mxu0 %v924
        %959 = vmatprep.subr.mxu0 0.0
        %960 = vmatpush1.xpose.msra.mxu0 %v927
        %961 = vmatprep.subr.mxu0 0.0
        %962 = vmatpush1.xpose.msra.mxu0 0.0
        %963 = vmatprep.subr.mxu0 0.0
        %964 = vmatpush1.xpose.msra.mxu0 0.0
        %965 = vmatprep.subr.mxu0 0.0
        %966 = vmatpush1.xpose.msra.mxu0 0.0
        %967 = vmatprep.subr.mxu0 0.0
        %968 = vmatpush1.xpose.msra.mxu0 0.0
        %969 = vmatprep.subr.mxu0 0.0
        %970 = vmatpush1.xpose.msra.mxu0 0.0
        %971 = vmatprep.subr.mxu0 0.0
        %972 = vmatpush1.xpose.msra.mxu0 0.0
        %973 = vmatprep.subr.mxu0 0.0
        %974 = vmatpush1.xpose.msra.mxu0 0.0
        %975 = vmatprep.subr.mxu0 0.0
        %976 = vmatpush1.xpose.msra.mxu0 0.0
        %977 = vmatprep.subr.mxu0 0.0
        %978 = vmatpush1.xpose.msra.mxu0 0.0
        %979 = vmatprep.subr.mxu0 0.0
        %980 = vmatpush1.xpose.msra.mxu0 0.0
        %981 = vmatprep.subr.mxu0 0.0
        %982 = vmatpush1.xpose.msra.mxu0 0.0
        %983 = vmatprep.subr.mxu0 0.0
        %984 = vmatpush1.xpose.msra.mxu0 0.0
        %985 = vmatprep.subr.mxu0 0.0
        %986 = vmatpush1.xpose.msra.mxu0 0.0
        %987 = vmatprep.subr.mxu0 0.0
        %988 = vmatpush1.xpose.msra.mxu0 0.0
        %989 = vmatprep.subr.mxu0 0.0
        %990 = vmatpush1.xpose.msra.mxu0 0.0
        %991 = vmatprep.subr.mxu0 0.0
        %992 = vmatpush1.xpose.msra.mxu0 0.0
        %993 = vmatprep.mubr.f32.mxu0 0.0
        %994 = vmatmul.mubr.f32.gmra.mrb[0].mxu0 %v876
        %v995 = vpop.f32.mrb[0].mxu0
        %v996 = vadd.f32 %v867, %v995
        %v997 = vpop.f32.mrb[0].mxu0
        %998 = vmatprep.mubr.f32.mxu0 0.0
        %999 = vmatmul.mubr.f32.gmra.mrb[0].mxu0 %v879
        %v1000 = vpop.f32.mrb[0].mxu0
        %v1001 = vadd.f32 %v872, %v1000
        %v1002 = vpop.f32.mrb[0].mxu0
        %1003 = vdwg.mxu0
        %v1004 = vmax.f32 %v996, 0.0
        %v1005 = vmax.f32 %v1001, 0.0
        %v1006 = vld [vmem:[%s4] sm:$0xff]
        %v1007 = vld [vmem:[%s9] sm:$0xff]
        %1009 = vset.pattern.permute.xlu0 0
        %1010 = vperm.xlu0 %1009, %v1007
        %v1011 = vpop.permute.xlu0 %1010
        %vm1013 = vcmask 130048
        %v1015 = vsel %vm1013, %v1006, 0
        %1017 = vmatprep.subr.mxu0 0.0
        %1018 = vmatpush1.msra.mxu0 %v1004
        %1019 = vmatprep.subr.mxu0 0.0
        %1020 = vmatpush1.msra.mxu0 %v1005
        %1021 = vmatprep.subr.mxu0 0.0
        %1022 = vmatpush1.msra.mxu0 0.0
        %1023 = vmatprep.subr.mxu0 0.0
        %1024 = vmatpush1.msra.mxu0 0.0
        %1025 = vmatprep.subr.mxu0 0.0
        %1026 = vmatpush1.msra.mxu0 0.0
        %1027 = vmatprep.subr.mxu0 0.0
        %1028 = vmatpush1.msra.mxu0 0.0
        %1029 = vmatprep.subr.mxu0 0.0
        %1030 = vmatpush1.msra.mxu0 0.0
        %1031 = vmatprep.subr.mxu0 0.0
        %1032 = vmatpush1.msra.mxu0 0.0
        %1033 = vmatprep.subr.mxu0 0.0
        %1034 = vmatpush1.msra.mxu0 0.0
        %1035 = vmatprep.subr.mxu0 0.0
        %1036 = vmatpush1.msra.mxu0 0.0
        %1037 = vmatprep.subr.mxu0 0.0
        %1038 = vmatpush1.msra.mxu0 0.0
        %1039 = vmatprep.subr.mxu0 0.0
        %1040 = vmatpush1.msra.mxu0 0.0
        %1041 = vmatprep.subr.mxu0 0.0
        %1042 = vmatpush1.msra.mxu0 0.0
        %1043 = vmatprep.subr.mxu0 0.0
        %1044 = vmatpush1.msra.mxu0 0.0
        %1045 = vmatprep.subr.mxu0 0.0
        %1046 = vmatpush1.msra.mxu0 0.0
        %1047 = vmatprep.subr.mxu0 0.0
        %1048 = vmatpush1.msra.mxu0 0.0
        %1049 = vmatprep.subr.mxu0 0.0
        %1050 = vmatpush1.msra.mxu0 0.0
        %1051 = vmatprep.subr.mxu0 0.0
        %1052 = vmatpush1.msra.mxu0 0.0
        %1053 = vmatprep.subr.mxu0 0.0
        %1054 = vmatpush1.msra.mxu0 0.0
        %1055 = vmatprep.subr.mxu0 0.0
        %1056 = vmatpush1.msra.mxu0 0.0
        %1057 = vmatprep.subr.mxu0 0.0
        %1058 = vmatpush1.msra.mxu0 0.0
        %1059 = vmatprep.subr.mxu0 0.0
        %1060 = vmatpush1.msra.mxu0 0.0
        %1061 = vmatprep.subr.mxu0 0.0
        %1062 = vmatpush1.msra.mxu0 0.0
        %1063 = vmatprep.subr.mxu0 0.0
        %1064 = vmatpush1.msra.mxu0 0.0
        %1065 = vmatprep.subr.mxu0 0.0
        %1066 = vmatpush1.msra.mxu0 0.0
        %1067 = vmatprep.subr.mxu0 0.0
        %1068 = vmatpush1.msra.mxu0 0.0
        %1069 = vmatprep.subr.mxu0 0.0
        %1070 = vmatpush1.msra.mxu0 0.0
        %1071 = vmatprep.subr.mxu0 0.0
        %1072 = vmatpush1.msra.mxu0 0.0
        %1073 = vmatprep.subr.mxu0 0.0
        %1074 = vmatpush1.msra.mxu0 0.0
        %1075 = vmatprep.subr.mxu0 0.0
        %1076 = vmatpush1.msra.mxu0 0.0
        %1077 = vmatprep.subr.mxu0 0.0
        %1078 = vmatpush1.msra.mxu0 0.0
        %1079 = vmatprep.subr.mxu0 0.0
        %1080 = vmatpush1.msra.mxu0 0.0
        %1081 = vmatprep.mubr.f32.mxu0 0.0
        %1082 = vmatmul.mubr.f32.gmra.mrb[0].mxu0 %v1015
        %v1083 = vpop.f32.mrb[0].mxu0
        %v1084 = vadd.f32 %v1011, %v1083
        %v1085 = vpop.f32.mrb[0].mxu0
        %1086 = vdwg.mxu0
        %v1087 = vmax.f32 %v1084, 0.0
        %v1088 = vld [vmem:[%s5] sm:$0x1]
        %v1089 = vld [vmem:[#allocation2] sm:$0x1]
        %1091 = vset.pattern.permute.xlu0 0
        %1092 = vperm.xlu0 %1091, %v1089
        %v1093 = vpop.permute.xlu0 %1092
        %v1095 = vlaneseq
        %v1096 = vshrl.u32 %v1095, 7
        %v1097 = vsub.s32 0, %v1096
        %v1098 = vrot.slane %v1093, %v1097
        %vm1099 = vcmask 64512
        %v1101 = vsel %vm1099, %v1088, 0
        %1103 = vmatprep.subr.mxu0 0.0
        %1104 = vmatpush1.msra.mxu0 %v1087
        %1105 = vmatprep.subr.mxu0 0.0
        %1106 = vmatpush1.msra.mxu0 0.0
        %1107 = vmatprep.subr.mxu0 0.0
        %1108 = vmatpush1.msra.mxu0 0.0
        %1109 = vmatprep.subr.mxu0 0.0
        %1110 = vmatpush1.msra.mxu0 0.0
        %1111 = vmatprep.subr.mxu0 0.0
        %1112 = vmatpush1.msra.mxu0 0.0
        %1113 = vmatprep.subr.mxu0 0.0
        %1114 = vmatpush1.msra.mxu0 0.0
        %1115 = vmatprep.subr.mxu0 0.0
        %1116 = vmatpush1.msra.mxu0 0.0
        %1117 = vmatprep.subr.mxu0 0.0
        %1118 = vmatpush1.msra.mxu0 0.0
        %1119 = vmatprep.subr.mxu0 0.0
        %1120 = vmatpush1.msra.mxu0 0.0
        %1121 = vmatprep.subr.mxu0 0.0
        %1122 = vmatpush1.msra.mxu0 0.0
        %1123 = vmatprep.subr.mxu0 0.0
        %1124 = vmatpush1.msra.mxu0 0.0
        %1125 = vmatprep.subr.mxu0 0.0
        %1126 = vmatpush1.msra.mxu0 0.0
        %1127 = vmatprep.subr.mxu0 0.0
        %1128 = vmatpush1.msra.mxu0 0.0
        %1129 = vmatprep.subr.mxu0 0.0
        %1130 = vmatpush1.msra.mxu0 0.0
        %1131 = vmatprep.subr.mxu0 0.0
        %1132 = vmatpush1.msra.mxu0 0.0
        %1133 = vmatprep.subr.mxu0 0.0
        %1134 = vmatpush1.msra.mxu0 0.0
        %1135 = vmatprep.subr.mxu0 0.0
        %1136 = vmatpush1.msra.mxu0 0.0
        %1137 = vmatprep.subr.mxu0 0.0
        %1138 = vmatpush1.msra.mxu0 0.0
        %1139 = vmatprep.subr.mxu0 0.0
        %1140 = vmatpush1.msra.mxu0 0.0
        %1141 = vmatprep.subr.mxu0 0.0
        %1142 = vmatpush1.msra.mxu0 0.0
        %1143 = vmatprep.subr.mxu0 0.0
        %1144 = vmatpush1.msra.mxu0 0.0
        %1145 = vmatprep.subr.mxu0 0.0
        %1146 = vmatpush1.msra.mxu0 0.0
        %1147 = vmatprep.subr.mxu0 0.0
        %1148 = vmatpush1.msra.mxu0 0.0
        %1149 = vmatprep.subr.mxu0 0.0
        %1150 = vmatpush1.msra.mxu0 0.0
        %1151 = vmatprep.subr.mxu0 0.0
        %1152 = vmatpush1.msra.mxu0 0.0
        %1153 = vmatprep.subr.mxu0 0.0
        %1154 = vmatpush1.msra.mxu0 0.0
        %1155 = vmatprep.subr.mxu0 0.0
        %1156 = vmatpush1.msra.mxu0 0.0
        %1157 = vmatprep.subr.mxu0 0.0
        %1158 = vmatpush1.msra.mxu0 0.0
        %1159 = vmatprep.subr.mxu0 0.0
        %1160 = vmatpush1.msra.mxu0 0.0
        %1161 = vmatprep.subr.mxu0 0.0
        %1162 = vmatpush1.msra.mxu0 0.0
        %1163 = vmatprep.subr.mxu0 0.0
        %1164 = vmatpush1.msra.mxu0 0.0
        %1165 = vmatprep.subr.mxu0 0.0
        %1166 = vmatpush1.msra.mxu0 0.0
        %1167 = vmatprep.mubr.f32.mxu0 0.0
        %1168 = vmatmul.mubr.f32.gmra.mrb[0].mxu0 %v1101
        %v1169 = vpop.f32.mrb[0].mxu0
        %v1170 = vadd.f32 %v1098, %v1169
        %v1171 = vpop.f32.mrb[0].mxu0
        %1172 = vdwg.mxu0
        %v1173 = vsub.f32 0.0, %v1170
        %v1174 = vmul.f32 %v1173, 1.442695
        %v1175 = vpow.pop %v1174
        %v1176 = vadd.f32 %v1175, 1.0
        %v1177 = vrcp.pop %v1176
        %1178 = vst [vmem:[%s381] sm:$0x1] %v1177
        %s1179 = sand.u32 %s271, 1
        %s1180 = scalar_lea.sflag [#allocation4], %s1179
        %s1181 = sand.u32 %s271, 1
        %s1182 = scalar_lea.vmem [#allocation3], %s1181
        // Predicated region
        $region65: #{tpu_custom_call.1} parent=63 // pred_check
          %p1183 = pneg %p281
        $region66: #{tpu_custom_call.1} parent=63 // pred_check_branch
          %1185 = sbr.rel (%p1183) target = $region68
        $region67: #{tpu_custom_call.1} parent=63 // pred_region
          %s1187 = ssub.s32 16, 16
          %1188 = vsyncadd %s1180, %s1187
          %s1189 = smul.addr %s27, 16
          %s1190 = scalar_lea.hbm %s11, %s1189
          %s1192 = sshll.u32 %s1182, 4
          %s1193 = int_to_ptr.vmem [resolvable:$true] %s1192
          %1195 = dma.vmem_to_hbm [thread:$0]  %s1193, 16, %s1190, %s1180
        $region68: #{tpu_custom_call.1} parent=63 // pred_fallthru
          _
      $region64: #{tpu_custom_call.1} parent=5 // pred_fallthru
        _
      %p1196 = scmp.le.s32.totalorder 2, %s22
      // Predicated region
      $region69: #{tpu_custom_call.1} parent=5 // pred_check
        %p1197 = pneg %p1196
      $region70: #{tpu_custom_call.1} parent=5 // pred_check_branch
        %1199 = sbr.rel (%p1197) target = $region72
      $region71: #{tpu_custom_call.1} parent=5 // pred_region
        %s1200 = ssub.s32 %s22, 2
        // Predicated region
        $region73: #{tpu_custom_call.1} parent=71 // pred_check
          %p1201 = pneg %p287
        $region74: #{tpu_custom_call.1} parent=71 // pred_check_branch
          %1203 = sbr.rel (%p1201) target = $region76
        $region75: #{tpu_custom_call.1} parent=71 // pred_region
          %s1204 = sand.u32 %s272, 1
          %s1205 = scalar_lea.sflag [#allocation4], %s1204
          %s1206 = sand.u32 %s272, 1
          %s1207 = scalar_lea.vmem [#allocation3], %s1206
          %1208 = dma.done %s1205, 16
        $region76: #{tpu_custom_call.1} parent=71 // pred_fallthru
          _
      $region72: #{tpu_custom_call.1} parent=5 // pred_fallthru
        _
    $region6: #{tpu_custom_call.1} parent=1 // loop_footer
      %s26 = sadd.s32 1, %s22
    $region7: #{tpu_custom_call.1} parent=1 // loop_footer_branch
      %21 = sbr.rel target = $region3
    $region8: #{tpu_custom_call.1} parent=1 // loop_exit
      _
    %1209 = vsyncpa [#allocation4], 1
    %s1210 = scalar_lea.sflag [#allocation4], 1
    %1211 = vsyncpa %s1210, 1

</llo_original>
